<compile_context>
chip_gen: v7x
topology: tpu7x:2x2x1
jax: 0.10.0
libtpu: 0.0.40
codegen_flags: <defaults>
</compile_context>

<pallas_src>
import jax
import jax.numpy as jnp
from jax.experimental import pallas as pl
from jax.experimental.pallas import tpu as pltpu

LANE = 128          # lane width (last-dim tiling)
SUBLANE_BF16 = 16   # bf16 sublane packing
TILE_MIN = 16       # batch tiles are multiples of 16 (bf16 x tiles)
NEG_BIG = -1e30     # "minus infinity" for padded action logits (finite, f32-safe)


def _round_up(n, m):
    return (n + m - 1) // m * m


def _cdiv(a, b):
    return (a + b - 1) // b


# ----------------------------------------------------------------------------
# Kernel
# ----------------------------------------------------------------------------
def policy_net_kernel(x_ref, w1_ref, b1_ref, w2_ref, b2_ref, w3_ref, b3_ref,
                      out_ref):
    """Fused MLP + softmax on one (tile_b, sp) batch tile.

    x and weights are bf16; biases are f32 [1, out]; accumulation and all
    elementwise math are f32.
    """
    x = x_ref[...]                                                    # bf16

    # fc1 + ReLU
    h1 = jnp.dot(x, w1_ref[...], preferred_element_type=jnp.float32) + b1_ref[...]
    h1 = jnp.maximum(h1, 0.0).astype(jnp.bfloat16)

    # fc2 + ReLU
    h2 = jnp.dot(h1, w2_ref[...], preferred_element_type=jnp.float32) + b2_ref[...]
    h2 = jnp.maximum(h2, 0.0).astype(jnp.bfloat16)

    # fc3 (logits, f32).  Padded action columns get bias = -1e30 -> exp() == 0.
    logits = jnp.dot(h2, w3_ref[...], preferred_element_type=jnp.float32) + b3_ref[...]

    # Numerically-stable softmax over the action (lane) axis.
    m = jnp.max(logits, axis=-1, keepdims=True)
    e = jnp.exp(logits - m)
    denom = jnp.sum(e, axis=-1, keepdims=True)
    # Exact normalization (approx reciprocal only sums rows to ~1e-3 of 1).
    out_ref[...] = (e / denom).astype(out_ref.dtype)


# ----------------------------------------------------------------------------
# Parameter preparation (pad to kernel layout, cast weights to bf16). Done
# once, outside the hot path.
# ----------------------------------------------------------------------------
def prepare_params(params):
    """params: f32 dict with w* as [in, out] and b* as [1, out] (true dims)."""
    state_dim, hidden_dim = params["w1"].shape
    action_dim = params["w3"].shape[1]

    sp = _round_up(state_dim, SUBLANE_BF16)   # MXU K axis only -> sublane pad
    hp = _round_up(hidden_dim, LANE)          # lane-dense hidden
    ap = _round_up(action_dim, LANE)          # lane-dense output

    def pad_w(w, r, c):
        out = jnp.zeros((r, c), jnp.bfloat16)
        return out.at[: w.shape[0], : w.shape[1]].set(w.astype(jnp.bfloat16))

    def pad_b(b, c, fill=0.0):
        out = jnp.full((1, c), fill, jnp.float32)
        return out.at[:, : b.shape[1]].set(b.astype(jnp.float32))

    padded = {
        "w1": pad_w(params["w1"], sp, hp),
        "b1": pad_b(params["b1"], hp),
        "w2": pad_w(params["w2"], hp, hp),
        "b2": pad_b(params["b2"], hp),
        "w3": pad_w(params["w3"], hp, ap),
        # Padded action columns pinned to -1e30 so softmax ignores them.
        "b3": pad_b(params["b3"], ap, fill=NEG_BIG),
    }
    dims = dict(state_dim=state_dim, hidden_dim=hidden_dim, action_dim=action_dim,
                sp=sp, hp=hp, ap=ap)
    return padded, dims


def _pick_tile_b(batch):
    """Multiple of 16; large enough for roofline efficiency, >=2 grid steps
    (for v7x's 2 TensorCores) whenever the batch spans more than one tile."""
    if batch <= 2 * TILE_MIN:
        return TILE_MIN
    return min(512, _round_up(_cdiv(batch, 2), TILE_MIN))


def prepare_inputs(x, dims, tile_b):
    """Pad + cast x to the (bp, sp) bf16 layout the kernel expects.  Call this
    once outside the hot loop to avoid a per-call pad copy."""
    batch = x.shape[0]
    bp = _round_up(batch, tile_b)
    sp = dims["sp"]
    xp = jnp.zeros((bp, sp), jnp.bfloat16)
    return xp.at[:batch, : dims["state_dim"]].set(x.astype(jnp.bfloat16))


# ----------------------------------------------------------------------------
# Forward wrapper
# ----------------------------------------------------------------------------
def policy_net_forward(x, padded_params, dims, tile_b=None, out_dtype=jnp.float32):
    """x: [batch, state_dim] (f32 or pre-padded bf16).
    Returns softmax probs [batch, action_dim] in `out_dtype`."""
    batch = x.shape[0]
    sp, hp, ap = dims["sp"], dims["hp"], dims["ap"]
    action_dim = dims["action_dim"]

    if tile_b is None:
        tile_b = _pick_tile_b(batch)
    tile_b = _round_up(tile_b, TILE_MIN)
    bp = _round_up(batch, tile_b)
    grid = (bp // tile_b,)

    # Pad/cast only when needed: pre-padded bf16 inputs skip the extra HBM pass.
    if x.shape == (bp, sp) and x.dtype == jnp.bfloat16:
        xp = x
    else:
        xp = prepare_inputs(x, dims, tile_b)

    w1, b1 = padded_params["w1"], padded_params["b1"]
    w2, b2 = padded_params["w2"], padded_params["b2"]
    w3, b3 = padded_params["w3"], padded_params["b3"]

    # Weights/biases: constant index_map -> stay resident in VMEM across steps.
    const2 = lambda i: (0, 0)
    in_specs = [
        pl.BlockSpec((tile_b, sp), lambda i: (i, 0)),   # x tile (pipelined, bf16)
        pl.BlockSpec((sp, hp), const2),                  # w1
        pl.BlockSpec((1, hp), const2),                   # b1
        pl.BlockSpec((hp, hp), const2),                  # w2
        pl.BlockSpec((1, hp), const2),                   # b2
        pl.BlockSpec((hp, ap), const2),                  # w3
        pl.BlockSpec((1, ap), const2),                   # b3
    ]
    out_spec = pl.BlockSpec((tile_b, ap), lambda i: (i, 0))

    out_itemsize = jnp.dtype(out_dtype).itemsize
    weight_bytes = (sp * hp + hp * hp + hp * ap) * 2 + (2 * hp + ap) * 4
    tile_bytes = tile_b * sp * 2 + tile_b * ap * out_itemsize
    interm_bytes = 4 * tile_b * max(hp, ap) * 4        # f32 h1/h2/logits/e headroom
    # Double-buffered tiles + (default-buffered) resident weights + slack.
    vmem_limit = int(2 * (weight_bytes + tile_bytes) * 1.5) + interm_bytes + (2 << 20)
    vmem_limit = min(max(vmem_limit, 8 << 20), 64 << 20)

    flops = 2 * bp * (sp * hp + hp * hp + hp * ap)
    bytes_accessed = (
        xp.size * 2                      # bf16 x in
        + bp * ap * out_itemsize         # probs out
        + weight_bytes                   # resident weights/biases (read once)
    )
    cost = pl.CostEstimate(flops=flops,
                           transcendentals=bp * ap,      # exp
                           bytes_accessed=bytes_accessed)

    out_padded = pl.pallas_call(
        policy_net_kernel,
        out_shape=jax.ShapeDtypeStruct((bp, ap), out_dtype),
        grid=grid,
        in_specs=in_specs,
        out_specs=out_spec,
        compiler_params=pltpu.CompilerParams(
            dimension_semantics=("parallel",),
            vmem_limit_bytes=vmem_limit),
        cost_estimate=cost,
    )(xp, w1, b1, w2, b2, w3, b3)

    return out_padded[:batch, :action_dim]


# ----------------------------------------------------------------------------
# Init + pure-JAX reference
# ----------------------------------------------------------------------------
def init_params(key, state_dim, hidden_dim, action_dim):
    """PyTorch-Linear-style init: U(-1/sqrt(fan_in), 1/sqrt(fan_in)).
    Weights stored transposed to [in, out]; biases as [1, out]."""
    keys = jax.random.split(key, 6)

    def linear(kw, kb, fan_in, fan_out):
        bound = 1.0 / jnp.sqrt(jnp.float32(fan_in))
        w = jax.random.uniform(kw, (fan_in, fan_out), jnp.float32, -bound, bound)
        b = jax.random.uniform(kb, (1, fan_out), jnp.float32, -bound, bound)
        return w, b

    w1, b1 = linear(keys[0], keys[1], state_dim, hidden_dim)
    w2, b2 = linear(keys[2], keys[3], hidden_dim, hidden_dim)
    w3, b3 = linear(keys[4], keys[5], hidden_dim, action_dim)
    return {"w1": w1, "b1": b1, "w2": w2, "b2": b2, "w3": w3, "b3": b3}


def policy_net_ref(x, params):
    h1 = jax.nn.relu(x @ params["w1"] + params["b1"])
    h2 = jax.nn.relu(h1 @ params["w2"] + params["b2"])
    logits = h2 @ params["w3"] + params["b3"]
    return jax.nn.softmax(logits, axis=1)


if __name__ == "__main__":
    # Small, module-consistent shapes: batch=2, state_dim=4, hidden_dim=32, action_dim=8
    batch, state_dim, hidden_dim, action_dim = 2, 4, 32, 8

    key = jax.random.PRNGKey(0)
    k_params, k_x = jax.random.split(key)

    params = init_params(k_params, state_dim, hidden_dim, action_dim)
    x = jax.random.normal(k_x, (batch, state_dim), jnp.float32)

    padded_params, dims = prepare_params(params)
    out = policy_net_forward(x, padded_params, dims)
    out = jax.block_until_ready(out)

    ref = policy_net_ref(x, params)  # pure-f32 reference
    assert out.shape == (batch, action_dim)
    # bf16 matmul inputs -> slightly looser tolerance than pure f32.
    assert jnp.allclose(out, ref, atol=1e-2, rtol=1e-2), "mismatch vs JAX reference"
    # softmax rows must sum to ~1 (exact divide -> only float rounding error)
    assert jnp.allclose(jnp.sum(out, axis=1), 1.0, atol=1e-3)

    print("KERNEL_OK")
</pallas_src>

<mosaic_0001>
module attributes {stable_mosaic.version = 11 : i64} {
  func.func @policy_net_kernel(%arg0: i32, %arg1: memref<16x16xbf16, #tpu.memory_space<vmem>>, %arg2: memref<16x128xbf16, #tpu.memory_space<vmem>>, %arg3: memref<1x128xf32, #tpu.memory_space<vmem>>, %arg4: memref<128x128xbf16, #tpu.memory_space<vmem>>, %arg5: memref<1x128xf32, #tpu.memory_space<vmem>>, %arg6: memref<128x128xbf16, #tpu.memory_space<vmem>>, %arg7: memref<1x128xf32, #tpu.memory_space<vmem>>, %arg8: memref<16x128xf32, #tpu.memory_space<vmem>>) attributes {dimension_semantics = [#tpu.dimension_semantics<parallel>], iteration_bounds = array<i64: 1>, scalar_prefetch = 0 : i64, scratch_operands = 0 : i64, tpu.core_type = #tpu.core_type<tc>, window_params = [{transform_indices = @transform_0, window_bounds = array<i64: 16, 16>}, {pipeline_mode = #tpu.pipeline_mode<synchronous>, transform_indices = @transform_1, window_bounds = array<i64: 16, 128>}, {pipeline_mode = #tpu.pipeline_mode<synchronous>, transform_indices = @transform_2, window_bounds = array<i64: 1, 128>}, {pipeline_mode = #tpu.pipeline_mode<synchronous>, transform_indices = @transform_3, window_bounds = array<i64: 128, 128>}, {pipeline_mode = #tpu.pipeline_mode<synchronous>, transform_indices = @transform_4, window_bounds = array<i64: 1, 128>}, {pipeline_mode = #tpu.pipeline_mode<synchronous>, transform_indices = @transform_5, window_bounds = array<i64: 128, 128>}, {pipeline_mode = #tpu.pipeline_mode<synchronous>, transform_indices = @transform_6, window_bounds = array<i64: 1, 128>}, {transform_indices = @transform_7, window_bounds = array<i64: 16, 128>}]} {
    %c0 = arith.constant 0 : index
    %c0_0 = arith.constant 0 : index
    %0 = vector.load %arg1[%c0, %c0_0] : memref<16x16xbf16, #tpu.memory_space<vmem>>, vector<16x16xbf16>
    %c0_1 = arith.constant 0 : index
    %c0_2 = arith.constant 0 : index
    %1 = vector.load %arg2[%c0_1, %c0_2] : memref<16x128xbf16, #tpu.memory_space<vmem>>, vector<16x128xbf16>
    %cst = arith.constant dense<0.000000e+00> : vector<16x128xf32>
    %2 = tpu.matmul %0, %1, %cst {dimension_numbers = #tpu.dot_dimension_numbers<[1], [0], [0], [1], [0, 0, 1, 1], [], []>} : vector<16x16xbf16>, vector<16x128xbf16>, vector<16x128xf32> -> vector<16x128xf32>
    %c0_3 = arith.constant 0 : index
    %c0_4 = arith.constant 0 : index
    %3 = vector.load %arg3[%c0_3, %c0_4] : memref<1x128xf32, #tpu.memory_space<vmem>>, vector<1x128xf32>
    %4 = vector.broadcast %3 : vector<1x128xf32> to vector<16x128xf32>
    %5 = arith.addf %2, %4 : vector<16x128xf32>
    %cst_5 = arith.constant 0.000000e+00 : f32
    %6 = vector.broadcast %cst_5 : f32 to vector<16x128xf32>
    %7 = arith.maximumf %5, %6 : vector<16x128xf32>
    %8 = arith.truncf %7 : vector<16x128xf32> to vector<16x128xbf16>
    %c0_6 = arith.constant 0 : index
    %c0_7 = arith.constant 0 : index
    %9 = vector.load %arg4[%c0_6, %c0_7] : memref<128x128xbf16, #tpu.memory_space<vmem>>, vector<128x128xbf16>
    %cst_8 = arith.constant dense<0.000000e+00> : vector<16x128xf32>
    %10 = tpu.matmul %8, %9, %cst_8 {dimension_numbers = #tpu.dot_dimension_numbers<[1], [0], [0], [1], [0, 0, 1, 1], [], []>} : vector<16x128xbf16>, vector<128x128xbf16>, vector<16x128xf32> -> vector<16x128xf32>
    %c0_9 = arith.constant 0 : index
    %c0_10 = arith.constant 0 : index
    %11 = vector.load %arg5[%c0_9, %c0_10] : memref<1x128xf32, #tpu.memory_space<vmem>>, vector<1x128xf32>
    %12 = vector.broadcast %11 : vector<1x128xf32> to vector<16x128xf32>
    %13 = arith.addf %10, %12 : vector<16x128xf32>
    %cst_11 = arith.constant 0.000000e+00 : f32
    %14 = vector.broadcast %cst_11 : f32 to vector<16x128xf32>
    %15 = arith.maximumf %13, %14 : vector<16x128xf32>
    %16 = arith.truncf %15 : vector<16x128xf32> to vector<16x128xbf16>
    %c0_12 = arith.constant 0 : index
    %c0_13 = arith.constant 0 : index
    %17 = vector.load %arg6[%c0_12, %c0_13] : memref<128x128xbf16, #tpu.memory_space<vmem>>, vector<128x128xbf16>
    %cst_14 = arith.constant dense<0.000000e+00> : vector<16x128xf32>
    %18 = tpu.matmul %16, %17, %cst_14 {dimension_numbers = #tpu.dot_dimension_numbers<[1], [0], [0], [1], [0, 0, 1, 1], [], []>} : vector<16x128xbf16>, vector<128x128xbf16>, vector<16x128xf32> -> vector<16x128xf32>
    %c0_15 = arith.constant 0 : index
    %c0_16 = arith.constant 0 : index
    %19 = vector.load %arg7[%c0_15, %c0_16] : memref<1x128xf32, #tpu.memory_space<vmem>>, vector<1x128xf32>
    %20 = vector.broadcast %19 : vector<1x128xf32> to vector<16x128xf32>
    %21 = arith.addf %18, %20 : vector<16x128xf32>
    %cst_17 = arith.constant dense<0xFF800000> : vector<16xf32>
    %22 = vector.multi_reduction <maximumf>, %21, %cst_17 [1] : vector<16x128xf32> to vector<16xf32>
    %23 = vector.shape_cast %22 : vector<16xf32> to vector<16x1xf32>
    %24 = vector.broadcast %23 : vector<16x1xf32> to vector<16x128xf32>
    %25 = arith.subf %21, %24 : vector<16x128xf32>
    %26 = math.exp %25 : vector<16x128xf32>
    %cst_18 = arith.constant dense<0.000000e+00> : vector<16xf32>
    %27 = vector.multi_reduction <add>, %26, %cst_18 [1] : vector<16x128xf32> to vector<16xf32>
    %28 = vector.shape_cast %27 : vector<16xf32> to vector<16x1xf32>
    %29 = vector.broadcast %28 : vector<16x1xf32> to vector<16x128xf32>
    %30 = arith.divf %26, %29 : vector<16x128xf32>
    %c0_19 = arith.constant 0 : index
    %c0_20 = arith.constant 0 : index
    %31 = vector.load %arg8[%c0_19, %c0_20] : memref<16x128xf32, #tpu.memory_space<vmem>>, vector<16x128xf32>
    tpu.vector_store %arg8[%c0_19, %c0_20], %30 {strides = array<i32>} : memref<16x128xf32, #tpu.memory_space<vmem>>, vector<16x128xf32>,
    return
  }
  func.func @transform_0(%arg0: i32) -> (i32, i32) {
    %c0_i32 = arith.constant 0 : i32
    %c0_i32_0 = arith.constant 0 : i32
    return %arg0, %c0_i32 : i32, i32
  }
  func.func @transform_1(%arg0: i32) -> (i32, i32) {
    %c0_i32 = arith.constant 0 : i32
    %c0_i32_0 = arith.constant 0 : i32
    %c0_i32_1 = arith.constant 0 : i32
    return %c0_i32, %c0_i32_0 : i32, i32
  }
  func.func @transform_2(%arg0: i32) -> (i32, i32) {
    %c0_i32 = arith.constant 0 : i32
    %c0_i32_0 = arith.constant 0 : i32
    %c0_i32_1 = arith.constant 0 : i32
    return %c0_i32, %c0_i32_0 : i32, i32
  }
  func.func @transform_3(%arg0: i32) -> (i32, i32) {
    %c0_i32 = arith.constant 0 : i32
    %c0_i32_0 = arith.constant 0 : i32
    %c0_i32_1 = arith.constant 0 : i32
    return %c0_i32, %c0_i32_0 : i32, i32
  }
  func.func @transform_4(%arg0: i32) -> (i32, i32) {
    %c0_i32 = arith.constant 0 : i32
    %c0_i32_0 = arith.constant 0 : i32
    %c0_i32_1 = arith.constant 0 : i32
    return %c0_i32, %c0_i32_0 : i32, i32
  }
  func.func @transform_5(%arg0: i32) -> (i32, i32) {
    %c0_i32 = arith.constant 0 : i32
    %c0_i32_0 = arith.constant 0 : i32
    %c0_i32_1 = arith.constant 0 : i32
    return %c0_i32, %c0_i32_0 : i32, i32
  }
  func.func @transform_6(%arg0: i32) -> (i32, i32) {
    %c0_i32 = arith.constant 0 : i32
    %c0_i32_0 = arith.constant 0 : i32
    %c0_i32_1 = arith.constant 0 : i32
    return %c0_i32, %c0_i32_0 : i32, i32
  }
  func.func @transform_7(%arg0: i32) -> (i32, i32) {
    %c0_i32 = arith.constant 0 : i32
    %c0_i32_0 = arith.constant 0 : i32
    return %arg0, %c0_i32 : i32, i32
  }
}

</mosaic_0001>

<llo_original>
// kernel: tpu_custom_call.1
$region0: #{tpu_custom_call.1}
  #allocation0 [shape = 'u32[]', space=smem, size = 0x4, offset = 0x4, fixed_abs, tag = 'smem constant byte address 0x4 - core index']
  #allocation1 [shape = 'u32[144,128]{1,0:T(1,128)}', space=vmem, size = 0x12000, scoped, tag = 'internal scratch']
  %s0 = inlined_call_operand.hbm [shape: bf16[16,16], index: 0, kind: input, shape index: {}]
  %s1 = inlined_call_operand.hbm [shape: bf16[16,128], index: 1, kind: input, shape index: {}]
  %s2 = inlined_call_operand.vmem [shape: f32[1,128], index: 2, kind: input, shape index: {}]
  %s3 = inlined_call_operand.hbm [shape: bf16[128,128], index: 3, kind: input, shape index: {}]
  %s4 = inlined_call_operand.vmem [shape: f32[1,128], index: 4, kind: input, shape index: {}]
  %s5 = inlined_call_operand.hbm [shape: bf16[128,128], index: 5, kind: input, shape index: {}]
  %s6 = inlined_call_operand.vmem [shape: f32[1,128], index: 6, kind: input, shape index: {}]
  %s7 = inlined_call_operand.hbm [shape: f32[16,128], index: 7, kind: output, shape index: {}]
  %s8 = sld [smem:[#allocation0]]
  $region54: #{tpu_custom_call.1} parent=0
    _
  %s10 = ssub.s32 1, %s8
  %s11 = scalar_select 0, %s10, %s8
  $region1: #{tpu_custom_call.1} parent=0
    #allocation2 [shape = 'u8[4096]{0}', space=vmem, size = 0x1000, scoped, tag = 'input window, operand 0, single buffered']
    #allocation3 [shape = 's32[1]{0}', space=sflag, size = 0x4, scoped, tag = 'scoped memory for tpu_custom_call.1']
    #allocation4 [shape = 's32[1]{0}', space=sflag, size = 0x4, scoped, tag = 'scoped memory for tpu_custom_call.1']
    #allocation5 [shape = 'u8[4096]{0}', space=vmem, size = 0x1000, scoped, tag = 'input window, operand 1, single buffered']
    #allocation6 [shape = 's32[1]{0}', space=sflag, size = 0x4, scoped, tag = 'scoped memory for tpu_custom_call.1']
    #allocation7 [shape = 'u8[32768]{0}', space=vmem, size = 0x8000, scoped, tag = 'input window, operand 3, single buffered']
    #allocation8 [shape = 'u8[32768]{0}', space=vmem, size = 0x8000, scoped, tag = 'input window, operand 5, single buffered']
    #allocation9 [shape = 's32[1]{0}', space=sflag, size = 0x4, scoped, tag = 'scoped memory for tpu_custom_call.1']
    #allocation10 [shape = 'u8[8192]{0}', space=vmem, size = 0x2000, scoped, tag = 'output window, operand 0, single buffered']
    %12 = vsyncpa [#allocation3], 0
    %13 = vsyncpa [#allocation6], 0
    %14 = vsyncpa [#allocation9], 0
    %15 = vsyncpa [#allocation4], 0
    // Predicated region
    $region2: #{tpu_custom_call.1} parent=1 // pred_check
      _
    $region3: #{tpu_custom_call.1} parent=1 // pred_check_branch
      %17 = sbr.rel (0) target = $region5
    $region4: #{tpu_custom_call.1} parent=1 // pred_region
      %s19 = ssub.s32 128, 128
      %20 = vsyncadd [#allocation3], %s19
      %s21 = sshll.u32 [#allocation2], 4
      %s22 = int_to_ptr.vmem [resolvable:$true] %s21
      %27 = dma.hbm_to_vmem [thread:$0]  %s0, 128, %s22, [#allocation3], 64, 64, 4
    $region5: #{tpu_custom_call.1} parent=1 // pred_fallthru
      _
    // Predicated region
    $region6: #{tpu_custom_call.1} parent=1 // pred_check
      _
    $region7: #{tpu_custom_call.1} parent=1 // pred_check_branch
      %29 = sbr.rel (0) target = $region9
    $region8: #{tpu_custom_call.1} parent=1 // pred_region
      %s31 = ssub.s32 128, 128
      %32 = vsyncadd [#allocation6], %s31
      %s33 = sshll.u32 [#allocation5], 4
      %s34 = int_to_ptr.vmem [resolvable:$true] %s33
      %39 = dma.hbm_to_vmem [thread:$0]  %s1, 128, %s34, [#allocation6], 64, 64, 4
    $region9: #{tpu_custom_call.1} parent=1 // pred_fallthru
      _
    // Predicated region
    $region10: #{tpu_custom_call.1} parent=1 // pred_check
      _
    $region11: #{tpu_custom_call.1} parent=1 // pred_check_branch
      %41 = sbr.rel (0) target = $region13
    $region12: #{tpu_custom_call.1} parent=1 // pred_region
      _
    $region13: #{tpu_custom_call.1} parent=1 // pred_fallthru
      _
    // Predicated region
    $region14: #{tpu_custom_call.1} parent=1 // pred_check
      _
    $region15: #{tpu_custom_call.1} parent=1 // pred_check_branch
      %43 = sbr.rel (0) target = $region17
    $region16: #{tpu_custom_call.1} parent=1 // pred_region
      %s45 = ssub.s32 1024, 1024
      %46 = vsyncadd [#allocation6], %s45
      %s47 = sshll.u32 [#allocation7], 4
      %s48 = int_to_ptr.vmem [resolvable:$true] %s47
      %53 = dma.hbm_to_vmem [thread:$0]  %s3, 1024, %s48, [#allocation6], 64, 64, 4
    $region17: #{tpu_custom_call.1} parent=1 // pred_fallthru
      _
    // Predicated region
    $region18: #{tpu_custom_call.1} parent=1 // pred_check
      _
    $region19: #{tpu_custom_call.1} parent=1 // pred_check_branch
      %55 = sbr.rel (0) target = $region21
    $region20: #{tpu_custom_call.1} parent=1 // pred_region
      _
    $region21: #{tpu_custom_call.1} parent=1 // pred_fallthru
      _
    // Predicated region
    $region22: #{tpu_custom_call.1} parent=1 // pred_check
      _
    $region23: #{tpu_custom_call.1} parent=1 // pred_check_branch
      %57 = sbr.rel (0) target = $region25
    $region24: #{tpu_custom_call.1} parent=1 // pred_region
      %s59 = ssub.s32 1024, 1024
      %60 = vsyncadd [#allocation9], %s59
      %s61 = sshll.u32 [#allocation8], 4
      %s62 = int_to_ptr.vmem [resolvable:$true] %s61
      %67 = dma.hbm_to_vmem [thread:$0]  %s5, 1024, %s62, [#allocation9], 64, 64, 4
    $region25: #{tpu_custom_call.1} parent=1 // pred_fallthru
      _
    // Predicated region
    $region26: #{tpu_custom_call.1} parent=1 // pred_check
      _
    $region27: #{tpu_custom_call.1} parent=1 // pred_check_branch
      %69 = sbr.rel (0) target = $region29
    $region28: #{tpu_custom_call.1} parent=1 // pred_region
      _
    $region29: #{tpu_custom_call.1} parent=1 // pred_fallthru
      _
    // Predicated region
    $region30: #{tpu_custom_call.1} parent=1 // pred_check
      _
    $region31: #{tpu_custom_call.1} parent=1 // pred_check_branch
      %71 = sbr.rel (0) target = $region33
    $region32: #{tpu_custom_call.1} parent=1 // pred_region
      %72 = dma.done [#allocation3], 128
    $region33: #{tpu_custom_call.1} parent=1 // pred_fallthru
      _
    // Predicated region
    $region34: #{tpu_custom_call.1} parent=1 // pred_check
      _
    $region35: #{tpu_custom_call.1} parent=1 // pred_check_branch
      %74 = sbr.rel (0) target = $region37
    $region36: #{tpu_custom_call.1} parent=1 // pred_region
      %75 = dma.done [#allocation6], 128
    $region37: #{tpu_custom_call.1} parent=1 // pred_fallthru
      _
    // Predicated region
    $region38: #{tpu_custom_call.1} parent=1 // pred_check
      _
    $region39: #{tpu_custom_call.1} parent=1 // pred_check_branch
      %77 = sbr.rel (0) target = $region41
    $region40: #{tpu_custom_call.1} parent=1 // pred_region
      %78 = dma.done [#allocation6], 1024
    $region41: #{tpu_custom_call.1} parent=1 // pred_fallthru
      _
    // Predicated region
    $region42: #{tpu_custom_call.1} parent=1 // pred_check
      _
    $region43: #{tpu_custom_call.1} parent=1 // pred_check_branch
      %80 = sbr.rel (0) target = $region45
    $region44: #{tpu_custom_call.1} parent=1 // pred_region
      %81 = dma.done [#allocation9], 1024
    $region45: #{tpu_custom_call.1} parent=1 // pred_fallthru
      _
    %v83 = vld [vmem:[#allocation2] sm:$0xf]
    %v84 = vld [vmem:[#allocation2 + $0x4] sm:$0xf]
    %v85 = vld [vmem:[#allocation5] sm:$0xf]
    %v86 = vld [vmem:[#allocation5 + $0x4] sm:$0xf]
    %v87 = vld [vmem:[%s2] sm:$0x1]
    %v89 = vlaneseq
    %v90 = vshrl.u32 %v89, 7
    %v91 = vsub.s32 0, %v90
    %v92 = vrot.slane %v87, %v91
    %v96 = vunpack.c.l.b16 %v83
    %v97 = vunpack.c.l.b16 %v84
    %v98 = vpack.c.b16 %v97, %v96
    %v101 = vunpack.c.l.b16 %v85
    %v102 = vunpack.c.l.b16 %v86
    %v103 = vpack.c.b16 %v102, %v101
    %vm105 = vcmask 130048
    %v107 = vsel %vm105, %v98, 0
    %109 = vmatprep.subr.bf16.mxu0 0
    %110 = vmatpush1.bf16.msra.mxu0 %v103
    %111 = vmatprep.subr.bf16.mxu0 0
    %112 = vmatpush1.bf16.msra.mxu0 0
    %113 = vmatprep.subr.bf16.mxu0 0
    %114 = vmatpush1.bf16.msra.mxu0 0
    %115 = vmatprep.subr.bf16.mxu0 0
    %116 = vmatpush1.bf16.msra.mxu0 0
    %117 = vmatprep.subr.bf16.mxu0 0
    %118 = vmatpush1.bf16.msra.mxu0 0
    %119 = vmatprep.subr.bf16.mxu0 0
    %120 = vmatpush1.bf16.msra.mxu0 0
    %121 = vmatprep.subr.bf16.mxu0 0
    %122 = vmatpush1.bf16.msra.mxu0 0
    %123 = vmatprep.subr.bf16.mxu0 0
    %124 = vmatpush1.bf16.msra.mxu0 0
    %125 = vmatprep.subr.bf16.mxu0 0
    %126 = vmatpush1.bf16.msra.mxu0 0
    %127 = vmatprep.subr.bf16.mxu0 0
    %128 = vmatpush1.bf16.msra.mxu0 0
    %129 = vmatprep.subr.bf16.mxu0 0
    %130 = vmatpush1.bf16.msra.mxu0 0
    %131 = vmatprep.subr.bf16.mxu0 0
    %132 = vmatpush1.bf16.msra.mxu0 0
    %133 = vmatprep.subr.bf16.mxu0 0
    %134 = vmatpush1.bf16.msra.mxu0 0
    %135 = vmatprep.subr.bf16.mxu0 0
    %136 = vmatpush1.bf16.msra.mxu0 0
    %137 = vmatprep.subr.bf16.mxu0 0
    %138 = vmatpush1.bf16.msra.mxu0 0
    %139 = vmatprep.subr.bf16.mxu0 0
    %140 = vmatpush1.bf16.msra.mxu0 0
    %141 = vmatprep.mubr.bf16.mxu0 0
    %142 = vmatmul.mubr.bf16.gmra.mrb[0].mxu0 %v107
    %v143 = vpop.f32.mrb[0].mxu0
    %v144 = vadd.f32 %v92, %v143
    %v145 = vpop.f32.mrb[0].mxu0
    %v146 = vpop.f32.mrb[0].mxu0
    %v147 = vadd.f32 %v92, %v146
    %v148 = vpop.f32.mrb[0].mxu0
    %149 = vdwg.mxu0
    %v150 = vmax.f32 %v144, 0.0
    %v151 = vmax.f32 %v147, 0.0
    %v152 = vpack.c.bf16 %v151, %v150
    %v153 = vld [vmem:[#allocation7] sm:$0xf]
    %v154 = vld [vmem:[#allocation7 + $0x4] sm:$0xf]
    %v155 = vld [vmem:[#allocation7 + $0x8] sm:$0xf]
    %v156 = vld [vmem:[#allocation7 + $0xc] sm:$0xf]
    %v157 = vld [vmem:[#allocation7 + $0x10] sm:$0xf]
    %v158 = vld [vmem:[#allocation7 + $0x14] sm:$0xf]
    %v159 = vld [vmem:[#allocation7 + $0x18] sm:$0xf]
    %v160 = vld [vmem:[#allocation7 + $0x1c] sm:$0xf]
    %v161 = vld [vmem:[#allocation7 + $0x20] sm:$0xf]
    %v162 = vld [vmem:[#allocation7 + $0x24] sm:$0xf]
    %v163 = vld [vmem:[#allocation7 + $0x28] sm:$0xf]
    %v164 = vld [vmem:[#allocation7 + $0x2c] sm:$0xf]
    %v165 = vld [vmem:[#allocation7 + $0x30] sm:$0xf]
    %v166 = vld [vmem:[#allocation7 + $0x34] sm:$0xf]
    %v167 = vld [vmem:[#allocation7 + $0x38] sm:$0xf]
    %v168 = vld [vmem:[#allocation7 + $0x3c] sm:$0xf]
    %v169 = vld [vmem:[%s4] sm:$0x1]
    %v171 = vlaneseq
    %v172 = vshrl.u32 %v171, 7
    %v173 = vsub.s32 0, %v172
    %v174 = vrot.slane %v169, %v173
    %v192 = vunpack.c.l.b16 %v153
    %v193 = vunpack.c.l.b16 %v154
    %v194 = vunpack.c.l.b16 %v155
    %v195 = vunpack.c.l.b16 %v156
    %v196 = vunpack.c.l.b16 %v157
    %v197 = vunpack.c.l.b16 %v158
    %v198 = vunpack.c.l.b16 %v159
    %v199 = vunpack.c.l.b16 %v160
    %v200 = vunpack.c.l.b16 %v161
    %v201 = vunpack.c.l.b16 %v162
    %v202 = vunpack.c.l.b16 %v163
    %v203 = vunpack.c.l.b16 %v164
    %v204 = vunpack.c.l.b16 %v165
    %v205 = vunpack.c.l.b16 %v166
    %v206 = vunpack.c.l.b16 %v167
    %v207 = vunpack.c.l.b16 %v168
    %v208 = vpack.c.b16 %v193, %v192
    %v209 = vpack.c.b16 %v195, %v194
    %v210 = vpack.c.b16 %v197, %v196
    %v211 = vpack.c.b16 %v199, %v198
    %v212 = vpack.c.b16 %v201, %v200
    %v213 = vpack.c.b16 %v203, %v202
    %v214 = vpack.c.b16 %v205, %v204
    %v215 = vpack.c.b16 %v207, %v206
    %224 = vmatprep.subr.bf16.mxu0 0
    %225 = vmatpush1.bf16.msra.mxu0 %v208
    %226 = vmatprep.subr.bf16.mxu0 0
    %227 = vmatpush1.bf16.msra.mxu0 %v209
    %228 = vmatprep.subr.bf16.mxu0 0
    %229 = vmatpush1.bf16.msra.mxu0 %v210
    %230 = vmatprep.subr.bf16.mxu0 0
    %231 = vmatpush1.bf16.msra.mxu0 %v211
    %232 = vmatprep.subr.bf16.mxu0 0
    %233 = vmatpush1.bf16.msra.mxu0 %v212
    %234 = vmatprep.subr.bf16.mxu0 0
    %235 = vmatpush1.bf16.msra.mxu0 %v213
    %236 = vmatprep.subr.bf16.mxu0 0
    %237 = vmatpush1.bf16.msra.mxu0 %v214
    %238 = vmatprep.subr.bf16.mxu0 0
    %239 = vmatpush1.bf16.msra.mxu0 %v215
    %240 = vmatprep.subr.bf16.mxu0 0
    %241 = vmatpush1.bf16.msra.mxu0 0
    %242 = vmatprep.subr.bf16.mxu0 0
    %243 = vmatpush1.bf16.msra.mxu0 0
    %244 = vmatprep.subr.bf16.mxu0 0
    %245 = vmatpush1.bf16.msra.mxu0 0
    %246 = vmatprep.subr.bf16.mxu0 0
    %247 = vmatpush1.bf16.msra.mxu0 0
    %248 = vmatprep.subr.bf16.mxu0 0
    %249 = vmatpush1.bf16.msra.mxu0 0
    %250 = vmatprep.subr.bf16.mxu0 0
    %251 = vmatpush1.bf16.msra.mxu0 0
    %252 = vmatprep.subr.bf16.mxu0 0
    %253 = vmatpush1.bf16.msra.mxu0 0
    %254 = vmatprep.subr.bf16.mxu0 0
    %255 = vmatpush1.bf16.msra.mxu0 0
    %256 = vmatprep.mubr.bf16.mxu0 0
    %257 = vmatmul.mubr.bf16.gmra.mrb[0].mxu0 %v152
    %v258 = vpop.f32.mrb[0].mxu0
    %v259 = vadd.f32 %v174, %v258
    %v260 = vpop.f32.mrb[0].mxu0
    %v261 = vpop.f32.mrb[0].mxu0
    %v262 = vadd.f32 %v174, %v261
    %v263 = vpop.f32.mrb[0].mxu0
    %264 = vdwg.mxu0
    %v265 = vmax.f32 %v259, 0.0
    %v266 = vmax.f32 %v262, 0.0
    %v267 = vpack.c.bf16 %v266, %v265
    %v268 = vld [vmem:[#allocation8] sm:$0xf]
    %v269 = vld [vmem:[#allocation8 + $0x4] sm:$0xf]
    %v270 = vld [vmem:[#allocation8 + $0x8] sm:$0xf]
    %v271 = vld [vmem:[#allocation8 + $0xc] sm:$0xf]
    %v272 = vld [vmem:[#allocation8 + $0x10] sm:$0xf]
    %v273 = vld [vmem:[#allocation8 + $0x14] sm:$0xf]
    %v274 = vld [vmem:[#allocation8 + $0x18] sm:$0xf]
    %v275 = vld [vmem:[#allocation8 + $0x1c] sm:$0xf]
    %v276 = vld [vmem:[#allocation8 + $0x20] sm:$0xf]
    %v277 = vld [vmem:[#allocation8 + $0x24] sm:$0xf]
    %v278 = vld [vmem:[#allocation8 + $0x28] sm:$0xf]
    %v279 = vld [vmem:[#allocation8 + $0x2c] sm:$0xf]
    %v280 = vld [vmem:[#allocation8 + $0x30] sm:$0xf]
    %v281 = vld [vmem:[#allocation8 + $0x34] sm:$0xf]
    %v282 = vld [vmem:[#allocation8 + $0x38] sm:$0xf]
    %v283 = vld [vmem:[#allocation8 + $0x3c] sm:$0xf]
    %v284 = vld [vmem:[%s6] sm:$0x1]
    %v286 = vlaneseq
    %v287 = vshrl.u32 %v286, 7
    %v288 = vsub.s32 0, %v287
    %v289 = vrot.slane %v284, %v288
    %v307 = vunpack.c.l.b16 %v268
    %v308 = vunpack.c.l.b16 %v269
    %v309 = vunpack.c.l.b16 %v270
    %v310 = vunpack.c.l.b16 %v271
    %v311 = vunpack.c.l.b16 %v272
    %v312 = vunpack.c.l.b16 %v273
    %v313 = vunpack.c.l.b16 %v274
    %v314 = vunpack.c.l.b16 %v275
    %v315 = vunpack.c.l.b16 %v276
    %v316 = vunpack.c.l.b16 %v277
    %v317 = vunpack.c.l.b16 %v278
    %v318 = vunpack.c.l.b16 %v279
    %v319 = vunpack.c.l.b16 %v280
    %v320 = vunpack.c.l.b16 %v281
    %v321 = vunpack.c.l.b16 %v282
    %v322 = vunpack.c.l.b16 %v283
    %v323 = vpack.c.b16 %v308, %v307
    %v324 = vpack.c.b16 %v310, %v309
    %v325 = vpack.c.b16 %v312, %v311
    %v326 = vpack.c.b16 %v314, %v313
    %v327 = vpack.c.b16 %v316, %v315
    %v328 = vpack.c.b16 %v318, %v317
    %v329 = vpack.c.b16 %v320, %v319
    %v330 = vpack.c.b16 %v322, %v321
    %339 = vmatprep.subr.bf16.mxu0 0
    %340 = vmatpush1.bf16.msra.mxu0 %v323
    %341 = vmatprep.subr.bf16.mxu0 0
    %342 = vmatpush1.bf16.msra.mxu0 %v324
    %343 = vmatprep.subr.bf16.mxu0 0
    %344 = vmatpush1.bf16.msra.mxu0 %v325
    %345 = vmatprep.subr.bf16.mxu0 0
    %346 = vmatpush1.bf16.msra.mxu0 %v326
    %347 = vmatprep.subr.bf16.mxu0 0
    %348 = vmatpush1.bf16.msra.mxu0 %v327
    %349 = vmatprep.subr.bf16.mxu0 0
    %350 = vmatpush1.bf16.msra.mxu0 %v328
    %351 = vmatprep.subr.bf16.mxu0 0
    %352 = vmatpush1.bf16.msra.mxu0 %v329
    %353 = vmatprep.subr.bf16.mxu0 0
    %354 = vmatpush1.bf16.msra.mxu0 %v330
    %355 = vmatprep.subr.bf16.mxu0 0
    %356 = vmatpush1.bf16.msra.mxu0 0
    %357 = vmatprep.subr.bf16.mxu0 0
    %358 = vmatpush1.bf16.msra.mxu0 0
    %359 = vmatprep.subr.bf16.mxu0 0
    %360 = vmatpush1.bf16.msra.mxu0 0
    %361 = vmatprep.subr.bf16.mxu0 0
    %362 = vmatpush1.bf16.msra.mxu0 0
    %363 = vmatprep.subr.bf16.mxu0 0
    %364 = vmatpush1.bf16.msra.mxu0 0
    %365 = vmatprep.subr.bf16.mxu0 0
    %366 = vmatpush1.bf16.msra.mxu0 0
    %367 = vmatprep.subr.bf16.mxu0 0
    %368 = vmatpush1.bf16.msra.mxu0 0
    %369 = vmatprep.subr.bf16.mxu0 0
    %370 = vmatpush1.bf16.msra.mxu0 0
    %371 = vmatprep.mubr.bf16.mxu0 0
    %372 = vmatmul.mubr.bf16.gmra.mrb[0].mxu0 %v267
    %v373 = vpop.f32.mrb[0].mxu0
    %v374 = vadd.f32 %v289, %v373
    %v375 = vpop.f32.mrb[0].mxu0
    %v376 = vpop.f32.mrb[0].mxu0
    %v377 = vadd.f32 %v289, %v376
    %v378 = vpop.f32.mrb[0].mxu0
    %379 = vdwg.mxu0
    %380 = vmax.xlane.f32.xlu0 %v374
    %v381 = vpop.xlane.xlu0 %380
    %382 = vmax.xlane.f32.xlu0 %v377
    %v383 = vpop.xlane.xlu0 %382
    %v384 = vsub.f32 %v374, %v381
    %v385 = vsub.f32 %v377, %v383
    %v386 = vmul.f32 %v384, 1.442695
    %v387 = vpow.pop %v386
    %v388 = vmul.f32 %v385, 1.442695
    %v389 = vpow.pop %v388
    %390 = vadd.xlane.f32.xlu0 %v387
    %v391 = vpop.xlane.xlu0 %390
    %392 = vadd.xlane.f32.xlu0 %v389
    %v393 = vpop.xlane.xlu0 %392
    %v394 = vrcp.pop %v391
    %v395 = vmul.f32 %v387, %v394
    %v396 = vrcp.pop %v393
    %v397 = vmul.f32 %v389, %v396
    %398 = vst [vmem:[#allocation10] sm:$0xff] %v395
    %399 = vst [vmem:[#allocation10 + $0x8] sm:$0xff] %v397
    // Predicated region
    $region46: #{tpu_custom_call.1} parent=1 // pred_check
      _
    $region47: #{tpu_custom_call.1} parent=1 // pred_check_branch
      %401 = sbr.rel (0) target = $region49
    $region48: #{tpu_custom_call.1} parent=1 // pred_region
      %s403 = ssub.s32 256, 256
      %404 = vsyncadd [#allocation4], %s403
      %s405 = sshll.u32 [#allocation10], 4
      %s406 = int_to_ptr.vmem [resolvable:$true] %s405
      %411 = dma.vmem_to_hbm [thread:$0]  %s406, 256, %s7, [#allocation4], 128, 128, 8
    $region49: #{tpu_custom_call.1} parent=1 // pred_fallthru
      _
    // Predicated region
    $region50: #{tpu_custom_call.1} parent=1 // pred_check
      _
    $region51: #{tpu_custom_call.1} parent=1 // pred_check_branch
      %413 = sbr.rel (0) target = $region53
    $region52: #{tpu_custom_call.1} parent=1 // pred_region
      %414 = dma.done [#allocation4], 256
    $region53: #{tpu_custom_call.1} parent=1 // pred_fallthru
      _
    %415 = vsyncpa [#allocation3], 1
    %416 = vsyncpa [#allocation6], 1
    %417 = vsyncpa [#allocation9], 1
    %418 = vsyncpa [#allocation4], 1

</llo_original>
